<compile_context>
chip_gen: v6e
topology: v6e:2x2x1
jax: 0.10.0
libtpu: 0.0.40
codegen_flags: <defaults>
</compile_context>

<pallas_src>
import jax
import jax.numpy as jnp
from jax.experimental import pallas as pl
from jax.experimental.pallas import tpu as pltpu

D_IN, D1, D2, D3, D_OUT = 512, 2048, 1024, 512, 256
_MiB = 1024 * 1024


def _round_up(n, m):
    return (n + m - 1) // m * m


def _pick_tile_m(batch, cap):
    """Rows per grid step: >=8 (f32 sublane), multiple of 8, <= cap.
    For B >= 32, cap at ceil(B/2) so the grid has >= 2 steps and both v7x
    TensorCores are used via the 'parallel' batch axis."""
    cap = max(8, _round_up(cap, 8))
    if batch >= 32:
        tile = _round_up(-(-batch // 2), 16)
    else:
        tile = _round_up(max(batch, 8), 8)
    return min(cap, tile)


# ----------------------------------------------------------------------------
# Parameter preparation (runs ONCE, at init -- not per forward call).
# ----------------------------------------------------------------------------
def init_params(key):
    """PyTorch Linear-style init. Weights stored as (in, out) = torch W^T;
    biases as (1, out).  (Real torch checkpoints: transpose W, reshape b.)"""
    dims = [(D_IN, D1), (D1, D2), (D2, D3), (D3, D_OUT)]
    params = {}
    keys = jax.random.split(key, 2 * len(dims))
    for idx, (din, dout) in enumerate(dims):
        bound = 1.0 / jnp.sqrt(jnp.float32(din))
        params[f"w{idx + 1}"] = jax.random.uniform(
            keys[2 * idx], (din, dout), jnp.float32, -bound, bound)
        params[f"b{idx + 1}"] = jax.random.uniform(
            keys[2 * idx + 1], (1, dout), jnp.float32, -bound, bound)
    return params


def fold_params(params):
    """Collapse the activation-free chain into a single affine map (f32,
    HIGHEST precision).  Accepts biases shaped (1, D) or (D,)."""
    hp = jax.lax.Precision.HIGHEST
    w = params["w1"].astype(jnp.float32)
    b = jnp.reshape(params["b1"], (1, -1)).astype(jnp.float32)
    for i in range(2, 5):
        wi = params[f"w{i}"].astype(jnp.float32)
        bi = jnp.reshape(params[f"b{i}"], (1, -1)).astype(jnp.float32)
        w = jnp.dot(w, wi, precision=hp)
        b = jnp.dot(b, wi, precision=hp) + bi
    return w, b  # (512, 256) f32, (1, 256) f32


def prepare_fused_params(params):
    """Pre-cast weights to bf16 (MXU-native) once; biases stay f32."""
    fp = {}
    for i in range(1, 5):
        fp[f"w{i}"] = params[f"w{i}"].astype(jnp.bfloat16)
        fp[f"b{i}"] = jnp.reshape(params[f"b{i}"], (1, -1)).astype(jnp.float32)
    return fp


# ----------------------------------------------------------------------------
# Kernel 1 (DEFAULT): collapsed single-GEMM affine map, f32 throughout.
# ----------------------------------------------------------------------------
def _collapsed_encoder_kernel(x_ref, w_ref, b_ref, o_ref):
    acc = jnp.dot(x_ref[...], w_ref[...], preferred_element_type=jnp.float32)
    o_ref[...] = (acc + b_ref[...]).astype(o_ref.dtype)


def encoder_forward_collapsed(x, w_fold, b_fold, *, tile_m=None,
                              out_dtype=jnp.float32):
    B = x.shape[0]
    if tile_m is None:
        tile_m = _pick_tile_m(B, cap=1024)
    tile_m = max(8, _round_up(tile_m, 8))
    grid = (pl.cdiv(B, tile_m),)

    # Footprint-based scoped-VMEM limit (stays well under v7x's 64 MiB).
    need = (2 * tile_m * D_IN * 4                 # x tiles (double-buffered)
            + 2 * D_IN * D_OUT * 4                # folded W (f32)
            + 8 * D_OUT * 4                       # bias (sublane-padded)
            + 2 * tile_m * D_OUT * jnp.dtype(out_dtype).itemsize)
    vmem_limit = int(min(max(2 * need, 24 * _MiB), 48 * _MiB))

    return pl.pallas_call(
        _collapsed_encoder_kernel,
        out_shape=jax.ShapeDtypeStruct((B, D_OUT), out_dtype),
        grid_spec=pltpu.PrefetchScalarGridSpec(
            num_scalar_prefetch=0,
            grid=grid,
            in_specs=[
                pl.BlockSpec((tile_m, D_IN), lambda i: (i, 0)),   # x tile
                pl.BlockSpec((D_IN, D_OUT), lambda i: (0, 0)),    # folded W (resident)
                pl.BlockSpec((1, D_OUT), lambda i: (0, 0)),       # folded b (resident)
            ],
            out_specs=pl.BlockSpec((tile_m, D_OUT), lambda i: (i, 0)),
        ),
        compiler_params=pltpu.CompilerParams(
            dimension_semantics=("parallel",),
            vmem_limit_bytes=vmem_limit,
        ),
    )(x, w_fold, b_fold)


# ----------------------------------------------------------------------------
# Kernel 2 (fallback): fused 4-layer chain, bf16 operands + f32 accumulation.
# ----------------------------------------------------------------------------
def _fused_encoder_kernel(x_ref, w1, b1, w2, b2, w3, b3, w4, b4, o_ref):
    h = x_ref[...].astype(jnp.bfloat16)           # cast in-kernel (VPU, hidden under MXU)
    a = jnp.dot(h, w1[...], preferred_element_type=jnp.float32) + b1[...]
    h = a.astype(jnp.bfloat16)
    a = jnp.dot(h, w2[...], preferred_element_type=jnp.float32) + b2[...]
    h = a.astype(jnp.bfloat16)
    a = jnp.dot(h, w3[...], preferred_element_type=jnp.float32) + b3[...]
    h = a.astype(jnp.bfloat16)
    a = jnp.dot(h, w4[...], preferred_element_type=jnp.float32) + b4[...]
    o_ref[...] = a.astype(o_ref.dtype)


def _resident_spec(shape, single_buffer):
    # Constant index_map -> fetched once, stays VMEM-resident across grid steps.
    if single_buffer:
        return pl.BlockSpec(shape, lambda i: (0, 0), pipeline_mode=pl.Buffered(1))
    return pl.BlockSpec(shape, lambda i: (0, 0))


def _fused_pallas_call(x, fp, tile_m, single_buffer):
    B = x.shape[0]
    grid = (pl.cdiv(B, tile_m),)
    w_bufs = 1 if single_buffer else 2
    need = (w_bufs * (D_IN * D1 + D1 * D2 + D2 * D3 + D3 * D_OUT) * 2   # bf16 weights
            + 8 * (D1 + D2 + D3 + D_OUT) * 4                            # biases (padded)
            + 2 * tile_m * D_IN * 4                                     # x tiles
            + 2 * tile_m * D_OUT * 4                                    # out tiles
            + tile_m * (D1 + D2) * 4)                                   # live f32 intermediates
    vmem_limit = int(min(max(2 * need, 32 * _MiB), 48 * _MiB))

    return pl.pallas_call(
        _fused_encoder_kernel,
        out_shape=jax.ShapeDtypeStruct((B, D_OUT), jnp.float32),
        grid_spec=pltpu.PrefetchScalarGridSpec(
            num_scalar_prefetch=0,
            grid=grid,
            in_specs=[
                pl.BlockSpec((tile_m, D_IN), lambda i: (i, 0)),   # x tile
                _resident_spec((D_IN, D1), single_buffer),
                _resident_spec((1, D1), single_buffer),
                _resident_spec((D1, D2), single_buffer),
                _resident_spec((1, D2), single_buffer),
                _resident_spec((D2, D3), single_buffer),
                _resident_spec((1, D3), single_buffer),
                _resident_spec((D3, D_OUT), single_buffer),
                _resident_spec((1, D_OUT), single_buffer),
            ],
            out_specs=pl.BlockSpec((tile_m, D_OUT), lambda i: (i, 0)),
        ),
        compiler_params=pltpu.CompilerParams(
            dimension_semantics=("parallel",),
            vmem_limit_bytes=vmem_limit,
        ),
    )(x, fp["w1"], fp["b1"], fp["w2"], fp["b2"],
      fp["w3"], fp["b3"], fp["w4"], fp["b4"])


def encoder_forward_fused(x, fused_params, *, tile_m=None):
    B = x.shape[0]
    if tile_m is None:
        tile_m = _pick_tile_m(B, cap=512)
    tile_m = max(8, _round_up(tile_m, 8))
    if hasattr(pl, "Buffered"):
        try:
            return _fused_pallas_call(x, fused_params, tile_m, single_buffer=True)
        except Exception:
            pass  # Buffered(1)/pipeline_mode unsupported -> default double-buffering
    return _fused_pallas_call(x, fused_params, tile_m, single_buffer=False)


# ----------------------------------------------------------------------------
# Module wrapper: all parameter preprocessing happens ONCE here.
# ----------------------------------------------------------------------------
class PallasEncoder:
    """Default forward = collapsed single-GEMM path (HBM-roofline); the fused
    4-layer kernel is kept only as a fallback/validation path."""

    def __init__(self, params):
        self.w_fold, self.b_fold = fold_params(params)      # once, not per call
        self.fused_params = prepare_fused_params(params)    # once (bf16 cast)

    def __call__(self, x, out_dtype=jnp.float32):
        return encoder_forward_collapsed(x, self.w_fold, self.b_fold,
                                         out_dtype=out_dtype)

    def forward_fused(self, x):
        return encoder_forward_fused(x, self.fused_params)


# ----------------------------------------------------------------------------
# References.
# ----------------------------------------------------------------------------
def _reference_fp32(x, params):
    hp = jax.lax.Precision.HIGHEST
    h = x
    for i in range(1, 5):
        h = jnp.dot(h, params[f"w{i}"], precision=hp) + params[f"b{i}"]
    return h


def _reference_mixed(x, params):
    # Same mixed-precision recipe as the fused kernel (bf16 operands, f32 acc).
    h = x.astype(jnp.bfloat16)
    a = None
    for i in range(1, 5):
        a = jnp.dot(h, params[f"w{i}"].astype(jnp.bfloat16),
                    preferred_element_type=jnp.float32) + params[f"b{i}"]
        h = a.astype(jnp.bfloat16)
    return a


if __name__ == "__main__":
    key = jax.random.PRNGKey(0)
    k_x, k_p = jax.random.split(key)

    B = 4
    x = jax.random.normal(k_x, (B, D_IN), dtype=jnp.float32)
    params = init_params(k_p)

    enc = PallasEncoder(params)   # fold + bf16 cast happen exactly once here

    out_coll = jax.block_until_ready(enc(x))               # default path
    out_fused = jax.block_until_ready(enc.forward_fused(x))  # fallback path

    ref32 = _reference_fp32(x, params)
    refmx = _reference_mixed(x, params)

    assert out_coll.shape == (B, D_OUT), out_coll.shape
    assert out_fused.shape == (B, D_OUT), out_fused.shape
    assert jnp.allclose(out_coll, ref32, atol=1e-2, rtol=1e-2), \
        "collapsed kernel mismatch vs fp32 reference"
    assert jnp.allclose(out_fused, refmx, atol=2e-3, rtol=2e-3), \
        "fused kernel mismatch vs mixed-precision reference"
    assert jnp.allclose(out_fused, ref32, atol=2e-2, rtol=2e-2), \
        "fused kernel mismatch vs fp32 reference"

    print("KERNEL_OK")
</pallas_src>

<mosaic_0001>
module attributes {stable_mosaic.version = 11 : i64} {
  func.func @_collapsed_encoder_kernel(%arg0: i32, %arg1: memref<8x512xf32, #tpu.memory_space<vmem>>, %arg2: memref<512x256xf32, #tpu.memory_space<vmem>>, %arg3: memref<1x256xf32, #tpu.memory_space<vmem>>, %arg4: memref<8x256xf32, #tpu.memory_space<vmem>>) attributes {dimension_semantics = [#tpu.dimension_semantics<parallel>], iteration_bounds = array<i64: 1>, scalar_prefetch = 0 : i64, scratch_operands = 0 : i64, tpu.core_type = #tpu.core_type<tc>, window_params = [{transform_indices = @transform_0, window_bounds = array<i64: 8, 512>}, {pipeline_mode = #tpu.pipeline_mode<synchronous>, transform_indices = @transform_1, window_bounds = array<i64: 512, 256>}, {pipeline_mode = #tpu.pipeline_mode<synchronous>, transform_indices = @transform_2, window_bounds = array<i64: 1, 256>}, {transform_indices = @transform_3, window_bounds = array<i64: 8, 256>}]} {
    %c0 = arith.constant 0 : index
    %c0_0 = arith.constant 0 : index
    %0 = vector.load %arg1[%c0, %c0_0] : memref<8x512xf32, #tpu.memory_space<vmem>>, vector<8x512xf32>
    %c0_1 = arith.constant 0 : index
    %c0_2 = arith.constant 0 : index
    %1 = vector.load %arg2[%c0_1, %c0_2] : memref<512x256xf32, #tpu.memory_space<vmem>>, vector<512x256xf32>
    %cst = arith.constant dense<0.000000e+00> : vector<8x256xf32>
    %2 = tpu.matmul %0, %1, %cst {dimension_numbers = #tpu.dot_dimension_numbers<[1], [0], [0], [1], [0, 0, 1, 1], [], []>} : vector<8x512xf32>, vector<512x256xf32>, vector<8x256xf32> -> vector<8x256xf32>
    %c0_3 = arith.constant 0 : index
    %c0_4 = arith.constant 0 : index
    %3 = vector.load %arg3[%c0_3, %c0_4] : memref<1x256xf32, #tpu.memory_space<vmem>>, vector<1x256xf32>
    %4 = vector.broadcast %3 : vector<1x256xf32> to vector<8x256xf32>
    %5 = arith.addf %2, %4 : vector<8x256xf32>
    %c0_5 = arith.constant 0 : index
    %c0_6 = arith.constant 0 : index
    %6 = vector.load %arg4[%c0_5, %c0_6] : memref<8x256xf32, #tpu.memory_space<vmem>>, vector<8x256xf32>
    tpu.vector_store %arg4[%c0_5, %c0_6], %5 {strides = array<i32>} : memref<8x256xf32, #tpu.memory_space<vmem>>, vector<8x256xf32>,
    return
  }
  func.func @transform_0(%arg0: i32) -> (i32, i32) {
    %c0_i32 = arith.constant 0 : i32
    %c0_i32_0 = arith.constant 0 : i32
    return %arg0, %c0_i32 : i32, i32
  }
  func.func @transform_1(%arg0: i32) -> (i32, i32) {
    %c0_i32 = arith.constant 0 : i32
    %c0_i32_0 = arith.constant 0 : i32
    %c0_i32_1 = arith.constant 0 : i32
    return %c0_i32, %c0_i32_0 : i32, i32
  }
  func.func @transform_2(%arg0: i32) -> (i32, i32) {
    %c0_i32 = arith.constant 0 : i32
    %c0_i32_0 = arith.constant 0 : i32
    %c0_i32_1 = arith.constant 0 : i32
    return %c0_i32, %c0_i32_0 : i32, i32
  }
  func.func @transform_3(%arg0: i32) -> (i32, i32) {
    %c0_i32 = arith.constant 0 : i32
    %c0_i32_0 = arith.constant 0 : i32
    return %arg0, %c0_i32 : i32, i32
  }
}

</mosaic_0001>

<llo_original>
// kernel: tpu_custom_call.1
$region0: #{tpu_custom_call.1}
  #allocation0 [shape = 'u32[]', space=smem, size = 0x4, offset = 0x4, fixed_abs, tag = 'smem constant byte address 0x4 - core index']
  #allocation1 [shape = 'u32[144,128]{1,0:T(1,128)}', space=vmem, size = 0x12000, scoped, tag = 'internal scratch']
  %s0 = inlined_call_operand.hbm [shape: f32[4,512], index: 0, kind: input, shape index: {}]
  %s1 = inlined_call_operand.hbm [shape: f32[512,256], index: 1, kind: input, shape index: {}]
  %s2 = inlined_call_operand.vmem [shape: f32[1,256], index: 2, kind: input, shape index: {}]
  %s3 = inlined_call_operand.hbm [shape: f32[4,256], index: 3, kind: output, shape index: {}]
  %s4 = sld [smem:[#allocation0]]
  $region30: #{tpu_custom_call.1} parent=0
    _
  %s6 = ssub.s32 1, %s4
  %s7 = scalar_select 0, %s6, %s4
  $region1: #{tpu_custom_call.1} parent=0
    #allocation2 [shape = 'u8[16384]{0}', space=vmem, size = 0x4000, scoped, tag = 'input window, operand 0, single buffered']
    #allocation3 [shape = 's32[1]{0}', space=sflag, size = 0x4, scoped, tag = 'scoped memory for tpu_custom_call.1']
    #allocation4 [shape = 's32[1]{0}', space=sflag, size = 0x4, scoped, tag = 'scoped memory for tpu_custom_call.1']
    #allocation5 [shape = 'u8[524288]{0}', space=vmem, size = 0x80000, scoped, tag = 'input window, operand 1, single buffered']
    #allocation6 [shape = 's32[1]{0}', space=sflag, size = 0x4, scoped, tag = 'scoped memory for tpu_custom_call.1']
    #allocation7 [shape = 'u8[8192]{0}', space=vmem, size = 0x2000, scoped, tag = 'output window, operand 0, single buffered']
    %8 = vsyncpa [#allocation3], 0
    %9 = vsyncpa [#allocation6], 0
    %10 = vsyncpa [#allocation4], 0
    // Predicated region
    $region2: #{tpu_custom_call.1} parent=1 // pred_check
      _
    $region3: #{tpu_custom_call.1} parent=1 // pred_check_branch
      %12 = sbr.rel (0) target = $region5
    $region4: #{tpu_custom_call.1} parent=1 // pred_region
      %s14 = ssub.s32 512, 256
      %15 = vsyncadd [#allocation3], %s14
      %s16 = sshll.u32 [#allocation2], 4
      %s17 = int_to_ptr.vmem [resolvable:$true] %s16
      %22 = dma.hbm_to_vmem [thread:$0]  %s0, 256, %s17, [#allocation3], 256, 256, 16
    $region5: #{tpu_custom_call.1} parent=1 // pred_fallthru
      _
    // Predicated region
    $region6: #{tpu_custom_call.1} parent=1 // pred_check
      _
    $region7: #{tpu_custom_call.1} parent=1 // pred_check_branch
      %24 = sbr.rel (0) target = $region9
    $region8: #{tpu_custom_call.1} parent=1 // pred_region
      %s26 = ssub.s32 16384, 16384
      %27 = vsyncadd [#allocation6], %s26
      %s28 = sshll.u32 [#allocation5], 4
      %s29 = int_to_ptr.vmem [resolvable:$true] %s28
      %34 = dma.hbm_to_vmem [thread:$0]  %s1, 16384, %s29, [#allocation6], 256, 256, 16
    $region9: #{tpu_custom_call.1} parent=1 // pred_fallthru
      _
    // Predicated region
    $region10: #{tpu_custom_call.1} parent=1 // pred_check
      _
    $region11: #{tpu_custom_call.1} parent=1 // pred_check_branch
      %36 = sbr.rel (0) target = $region13
    $region12: #{tpu_custom_call.1} parent=1 // pred_region
      _
    $region13: #{tpu_custom_call.1} parent=1 // pred_fallthru
      _
    // Predicated region
    $region14: #{tpu_custom_call.1} parent=1 // pred_check
      _
    $region15: #{tpu_custom_call.1} parent=1 // pred_check_branch
      %38 = sbr.rel (0) target = $region17
    $region16: #{tpu_custom_call.1} parent=1 // pred_region
      %39 = dma.done [#allocation3], 512
    $region17: #{tpu_custom_call.1} parent=1 // pred_fallthru
      _
    // Predicated region
    $region18: #{tpu_custom_call.1} parent=1 // pred_check
      _
    $region19: #{tpu_custom_call.1} parent=1 // pred_check_branch
      %41 = sbr.rel (0) target = $region21
    $region20: #{tpu_custom_call.1} parent=1 // pred_region
      %42 = dma.done [#allocation6], 16384
    $region21: #{tpu_custom_call.1} parent=1 // pred_fallthru
      _
    %v43 = vld [vmem:[#allocation2] sm:$0xff]
    %v44 = vld [vmem:[#allocation2 + $0x8] sm:$0xff]
    %v45 = vld [vmem:[#allocation2 + $0x10] sm:$0xff]
    %v46 = vld [vmem:[#allocation2 + $0x18] sm:$0xff]
    %v47 = vld [vmem:[#allocation5] sm:$0xff]
    %v48 = vld [vmem:[#allocation5 + $0x8] sm:$0xff]
    %v49 = vld [vmem:[#allocation5 + $0x10] sm:$0xff]
    %v50 = vld [vmem:[#allocation5 + $0x18] sm:$0xff]
    %v51 = vld [vmem:[#allocation5 + $0x20] sm:$0xff]
    %v52 = vld [vmem:[#allocation5 + $0x28] sm:$0xff]
    %v53 = vld [vmem:[#allocation5 + $0x30] sm:$0xff]
    %v54 = vld [vmem:[#allocation5 + $0x38] sm:$0xff]
    %v55 = vld [vmem:[#allocation5 + $0x40] sm:$0xff]
    %v56 = vld [vmem:[#allocation5 + $0x48] sm:$0xff]
    %v57 = vld [vmem:[#allocation5 + $0x50] sm:$0xff]
    %v58 = vld [vmem:[#allocation5 + $0x58] sm:$0xff]
    %v59 = vld [vmem:[#allocation5 + $0x60] sm:$0xff]
    %v60 = vld [vmem:[#allocation5 + $0x68] sm:$0xff]
    %v61 = vld [vmem:[#allocation5 + $0x70] sm:$0xff]
    %v62 = vld [vmem:[#allocation5 + $0x78] sm:$0xff]
    %v63 = vld [vmem:[#allocation5 + $0x80] sm:$0xff]
    %v64 = vld [vmem:[#allocation5 + $0x88] sm:$0xff]
    %v65 = vld [vmem:[#allocation5 + $0x90] sm:$0xff]
    %v66 = vld [vmem:[#allocation5 + $0x98] sm:$0xff]
    %v67 = vld [vmem:[#allocation5 + $0xa0] sm:$0xff]
    %v68 = vld [vmem:[#allocation5 + $0xa8] sm:$0xff]
    %v69 = vld [vmem:[#allocation5 + $0xb0] sm:$0xff]
    %v70 = vld [vmem:[#allocation5 + $0xb8] sm:$0xff]
    %v71 = vld [vmem:[#allocation5 + $0xc0] sm:$0xff]
    %v72 = vld [vmem:[#allocation5 + $0xc8] sm:$0xff]
    %v73 = vld [vmem:[#allocation5 + $0xd0] sm:$0xff]
    %v74 = vld [vmem:[#allocation5 + $0xd8] sm:$0xff]
    %v75 = vld [vmem:[#allocation5 + $0xe0] sm:$0xff]
    %v76 = vld [vmem:[#allocation5 + $0xe8] sm:$0xff]
    %v77 = vld [vmem:[#allocation5 + $0xf0] sm:$0xff]
    %v78 = vld [vmem:[#allocation5 + $0xf8] sm:$0xff]
    %v79 = vld [vmem:[#allocation5 + $0x100] sm:$0xff]
    %v80 = vld [vmem:[#allocation5 + $0x108] sm:$0xff]
    %v81 = vld [vmem:[#allocation5 + $0x110] sm:$0xff]
    %v82 = vld [vmem:[#allocation5 + $0x118] sm:$0xff]
    %v83 = vld [vmem:[#allocation5 + $0x120] sm:$0xff]
    %v84 = vld [vmem:[#allocation5 + $0x128] sm:$0xff]
    %v85 = vld [vmem:[#allocation5 + $0x130] sm:$0xff]
    %v86 = vld [vmem:[#allocation5 + $0x138] sm:$0xff]
    %v87 = vld [vmem:[#allocation5 + $0x140] sm:$0xff]
    %v88 = vld [vmem:[#allocation5 + $0x148] sm:$0xff]
    %v89 = vld [vmem:[#allocation5 + $0x150] sm:$0xff]
    %v90 = vld [vmem:[#allocation5 + $0x158] sm:$0xff]
    %v91 = vld [vmem:[#allocation5 + $0x160] sm:$0xff]
    %v92 = vld [vmem:[#allocation5 + $0x168] sm:$0xff]
    %v93 = vld [vmem:[#allocation5 + $0x170] sm:$0xff]
    %v94 = vld [vmem:[#allocation5 + $0x178] sm:$0xff]
    %v95 = vld [vmem:[#allocation5 + $0x180] sm:$0xff]
    %v96 = vld [vmem:[#allocation5 + $0x188] sm:$0xff]
    %v97 = vld [vmem:[#allocation5 + $0x190] sm:$0xff]
    %v98 = vld [vmem:[#allocation5 + $0x198] sm:$0xff]
    %v99 = vld [vmem:[#allocation5 + $0x1a0] sm:$0xff]
    %v100 = vld [vmem:[#allocation5 + $0x1a8] sm:$0xff]
    %v101 = vld [vmem:[#allocation5 + $0x1b0] sm:$0xff]
    %v102 = vld [vmem:[#allocation5 + $0x1b8] sm:$0xff]
    %v103 = vld [vmem:[#allocation5 + $0x1c0] sm:$0xff]
    %v104 = vld [vmem:[#allocation5 + $0x1c8] sm:$0xff]
    %v105 = vld [vmem:[#allocation5 + $0x1d0] sm:$0xff]
    %v106 = vld [vmem:[#allocation5 + $0x1d8] sm:$0xff]
    %v107 = vld [vmem:[#allocation5 + $0x1e0] sm:$0xff]
    %v108 = vld [vmem:[#allocation5 + $0x1e8] sm:$0xff]
    %v109 = vld [vmem:[#allocation5 + $0x1f0] sm:$0xff]
    %v110 = vld [vmem:[#allocation5 + $0x1f8] sm:$0xff]
    %v111 = vld [vmem:[#allocation5 + $0x200] sm:$0xff]
    %v112 = vld [vmem:[#allocation5 + $0x208] sm:$0xff]
    %v113 = vld [vmem:[#allocation5 + $0x210] sm:$0xff]
    %v114 = vld [vmem:[#allocation5 + $0x218] sm:$0xff]
    %v115 = vld [vmem:[#allocation5 + $0x220] sm:$0xff]
    %v116 = vld [vmem:[#allocation5 + $0x228] sm:$0xff]
    %v117 = vld [vmem:[#allocation5 + $0x230] sm:$0xff]
    %v118 = vld [vmem:[#allocation5 + $0x238] sm:$0xff]
    %v119 = vld [vmem:[#allocation5 + $0x240] sm:$0xff]
    %v120 = vld [vmem:[#allocation5 + $0x248] sm:$0xff]
    %v121 = vld [vmem:[#allocation5 + $0x250] sm:$0xff]
    %v122 = vld [vmem:[#allocation5 + $0x258] sm:$0xff]
    %v123 = vld [vmem:[#allocation5 + $0x260] sm:$0xff]
    %v124 = vld [vmem:[#allocation5 + $0x268] sm:$0xff]
    %v125 = vld [vmem:[#allocation5 + $0x270] sm:$0xff]
    %v126 = vld [vmem:[#allocation5 + $0x278] sm:$0xff]
    %v127 = vld [vmem:[#allocation5 + $0x280] sm:$0xff]
    %v128 = vld [vmem:[#allocation5 + $0x288] sm:$0xff]
    %v129 = vld [vmem:[#allocation5 + $0x290] sm:$0xff]
    %v130 = vld [vmem:[#allocation5 + $0x298] sm:$0xff]
    %v131 = vld [vmem:[#allocation5 + $0x2a0] sm:$0xff]
    %v132 = vld [vmem:[#allocation5 + $0x2a8] sm:$0xff]
    %v133 = vld [vmem:[#allocation5 + $0x2b0] sm:$0xff]
    %v134 = vld [vmem:[#allocation5 + $0x2b8] sm:$0xff]
    %v135 = vld [vmem:[#allocation5 + $0x2c0] sm:$0xff]
    %v136 = vld [vmem:[#allocation5 + $0x2c8] sm:$0xff]
    %v137 = vld [vmem:[#allocation5 + $0x2d0] sm:$0xff]
    %v138 = vld [vmem:[#allocation5 + $0x2d8] sm:$0xff]
    %v139 = vld [vmem:[#allocation5 + $0x2e0] sm:$0xff]
    %v140 = vld [vmem:[#allocation5 + $0x2e8] sm:$0xff]
    %v141 = vld [vmem:[#allocation5 + $0x2f0] sm:$0xff]
    %v142 = vld [vmem:[#allocation5 + $0x2f8] sm:$0xff]
    %v143 = vld [vmem:[#allocation5 + $0x300] sm:$0xff]
    %v144 = vld [vmem:[#allocation5 + $0x308] sm:$0xff]
    %v145 = vld [vmem:[#allocation5 + $0x310] sm:$0xff]
    %v146 = vld [vmem:[#allocation5 + $0x318] sm:$0xff]
    %v147 = vld [vmem:[#allocation5 + $0x320] sm:$0xff]
    %v148 = vld [vmem:[#allocation5 + $0x328] sm:$0xff]
    %v149 = vld [vmem:[#allocation5 + $0x330] sm:$0xff]
    %v150 = vld [vmem:[#allocation5 + $0x338] sm:$0xff]
    %v151 = vld [vmem:[#allocation5 + $0x340] sm:$0xff]
    %v152 = vld [vmem:[#allocation5 + $0x348] sm:$0xff]
    %v153 = vld [vmem:[#allocation5 + $0x350] sm:$0xff]
    %v154 = vld [vmem:[#allocation5 + $0x358] sm:$0xff]
    %v155 = vld [vmem:[#allocation5 + $0x360] sm:$0xff]
    %v156 = vld [vmem:[#allocation5 + $0x368] sm:$0xff]
    %v157 = vld [vmem:[#allocation5 + $0x370] sm:$0xff]
    %v158 = vld [vmem:[#allocation5 + $0x378] sm:$0xff]
    %v159 = vld [vmem:[#allocation5 + $0x380] sm:$0xff]
    %v160 = vld [vmem:[#allocation5 + $0x388] sm:$0xff]
    %v161 = vld [vmem:[#allocation5 + $0x390] sm:$0xff]
    %v162 = vld [vmem:[#allocation5 + $0x398] sm:$0xff]
    %v163 = vld [vmem:[#allocation5 + $0x3a0] sm:$0xff]
    %v164 = vld [vmem:[#allocation5 + $0x3a8] sm:$0xff]
    %v165 = vld [vmem:[#allocation5 + $0x3b0] sm:$0xff]
    %v166 = vld [vmem:[#allocation5 + $0x3b8] sm:$0xff]
    %v167 = vld [vmem:[#allocation5 + $0x3c0] sm:$0xff]
    %v168 = vld [vmem:[#allocation5 + $0x3c8] sm:$0xff]
    %v169 = vld [vmem:[#allocation5 + $0x3d0] sm:$0xff]
    %v170 = vld [vmem:[#allocation5 + $0x3d8] sm:$0xff]
    %v171 = vld [vmem:[#allocation5 + $0x3e0] sm:$0xff]
    %v172 = vld [vmem:[#allocation5 + $0x3e8] sm:$0xff]
    %v173 = vld [vmem:[#allocation5 + $0x3f0] sm:$0xff]
    %v174 = vld [vmem:[#allocation5 + $0x3f8] sm:$0xff]
    %v175 = vld [vmem:[%s2] sm:$0x3]
    %v177 = vlaneseq
    %v178 = vshrl.u32 %v177, 7
    %v179 = vsub.s32 0, %v178
    %v180 = vrot.slane %v175, %v179
    %v181 = vlaneseq
    %v182 = vshrl.u32 %v181, 7
    %v183 = vsub.s32 1, %v182
    %v184 = vrot.slane %v175, %v183
    %v191 = vcombine.low %v43, %v45
    %v192 = vcombine.high %v43, %v45
    %v193 = vcombine.low %v44, %v46
    %v194 = vcombine.high %v44, %v46
    %199 = vmatprep.subr.mxu0 %v78
    %200 = vmatpush1.msra.mxu0 %v77
    %201 = vmatprep.subr.mxu0 %v76
    %202 = vmatpush1.msra.mxu0 %v75
    %203 = vmatprep.subr.mxu0 %v74
    %204 = vmatpush1.msra.mxu0 %v73
    %205 = vmatprep.subr.mxu0 %v72
    %206 = vmatpush1.msra.mxu0 %v71
    %207 = vmatprep.subr.mxu0 %v70
    %208 = vmatpush1.msra.mxu0 %v69
    %209 = vmatprep.subr.mxu0 %v68
    %210 = vmatpush1.msra.mxu0 %v67
    %211 = vmatprep.subr.mxu0 %v66
    %212 = vmatpush1.msra.mxu0 %v65
    %213 = vmatprep.subr.mxu0 %v64
    %214 = vmatpush1.msra.mxu0 %v63
    %215 = vmatprep.subr.mxu0 %v62
    %216 = vmatpush1.msra.mxu0 %v61
    %217 = vmatprep.subr.mxu0 %v60
    %218 = vmatpush1.msra.mxu0 %v59
    %219 = vmatprep.subr.mxu0 %v58
    %220 = vmatpush1.msra.mxu0 %v57
    %221 = vmatprep.subr.mxu0 %v56
    %222 = vmatpush1.msra.mxu0 %v55
    %223 = vmatprep.subr.mxu0 %v54
    %224 = vmatpush1.msra.mxu0 %v53
    %225 = vmatprep.subr.mxu0 %v52
    %226 = vmatpush1.msra.mxu0 %v51
    %227 = vmatprep.subr.mxu0 %v50
    %228 = vmatpush1.msra.mxu0 %v49
    %229 = vmatprep.subr.mxu0 %v48
    %230 = vmatpush1.msra.mxu0 %v47
    %231 = vmatprep.subr.mxu0 %v110
    %232 = vmatpush2.msra.mxu0 %v109
    %233 = vmatprep.subr.mxu0 %v108
    %234 = vmatpush2.msra.mxu0 %v107
    %235 = vmatprep.subr.mxu0 %v106
    %236 = vmatpush2.msra.mxu0 %v105
    %237 = vmatprep.subr.mxu0 %v104
    %238 = vmatpush2.msra.mxu0 %v103
    %239 = vmatprep.subr.mxu0 %v102
    %240 = vmatpush2.msra.mxu0 %v101
    %241 = vmatprep.subr.mxu0 %v100
    %242 = vmatpush2.msra.mxu0 %v99
    %243 = vmatprep.subr.mxu0 %v98
    %244 = vmatpush2.msra.mxu0 %v97
    %245 = vmatprep.subr.mxu0 %v96
    %246 = vmatpush2.msra.mxu0 %v95
    %247 = vmatprep.subr.mxu0 %v94
    %248 = vmatpush2.msra.mxu0 %v93
    %249 = vmatprep.subr.mxu0 %v92
    %250 = vmatpush2.msra.mxu0 %v91
    %251 = vmatprep.subr.mxu0 %v90
    %252 = vmatpush2.msra.mxu0 %v89
    %253 = vmatprep.subr.mxu0 %v88
    %254 = vmatpush2.msra.mxu0 %v87
    %255 = vmatprep.subr.mxu0 %v86
    %256 = vmatpush2.msra.mxu0 %v85
    %257 = vmatprep.subr.mxu0 %v84
    %258 = vmatpush2.msra.mxu0 %v83
    %259 = vmatprep.subr.mxu0 %v82
    %260 = vmatpush2.msra.mxu0 %v81
    %261 = vmatprep.subr.mxu0 %v80
    %262 = vmatpush2.msra.mxu0 %v79
    %263 = vmatprep.mubr.f32.mxu0 %v192
    %264 = vmatmul.mubr.f32.gmra.mxu0 %v191
    %v265 = vpop.f32.mrf.mxu0
    %v266 = vadd.f32 %v180, %v265
    %v267 = vpop.f32.mrf.mxu0
    %v268 = vadd.f32 %v184, %v267
    %269 = vdwg.mxu0
    %270 = vmatprep.subr.mxu0 %v142
    %271 = vmatpush1.msra.mxu0 %v141
    %272 = vmatprep.subr.mxu0 %v140
    %273 = vmatpush1.msra.mxu0 %v139
    %274 = vmatprep.subr.mxu0 %v138
    %275 = vmatpush1.msra.mxu0 %v137
    %276 = vmatprep.subr.mxu0 %v136
    %277 = vmatpush1.msra.mxu0 %v135
    %278 = vmatprep.subr.mxu0 %v134
    %279 = vmatpush1.msra.mxu0 %v133
    %280 = vmatprep.subr.mxu0 %v132
    %281 = vmatpush1.msra.mxu0 %v131
    %282 = vmatprep.subr.mxu0 %v130
    %283 = vmatpush1.msra.mxu0 %v129
    %284 = vmatprep.subr.mxu0 %v128
    %285 = vmatpush1.msra.mxu0 %v127
    %286 = vmatprep.subr.mxu0 %v126
    %287 = vmatpush1.msra.mxu0 %v125
    %288 = vmatprep.subr.mxu0 %v124
    %289 = vmatpush1.msra.mxu0 %v123
    %290 = vmatprep.subr.mxu0 %v122
    %291 = vmatpush1.msra.mxu0 %v121
    %292 = vmatprep.subr.mxu0 %v120
    %293 = vmatpush1.msra.mxu0 %v119
    %294 = vmatprep.subr.mxu0 %v118
    %295 = vmatpush1.msra.mxu0 %v117
    %296 = vmatprep.subr.mxu0 %v116
    %297 = vmatpush1.msra.mxu0 %v115
    %298 = vmatprep.subr.mxu0 %v114
    %299 = vmatpush1.msra.mxu0 %v113
    %300 = vmatprep.subr.mxu0 %v112
    %301 = vmatpush1.msra.mxu0 %v111
    %302 = vmatprep.subr.mxu0 %v174
    %303 = vmatpush2.msra.mxu0 %v173
    %304 = vmatprep.subr.mxu0 %v172
    %305 = vmatpush2.msra.mxu0 %v171
    %306 = vmatprep.subr.mxu0 %v170
    %307 = vmatpush2.msra.mxu0 %v169
    %308 = vmatprep.subr.mxu0 %v168
    %309 = vmatpush2.msra.mxu0 %v167
    %310 = vmatprep.subr.mxu0 %v166
    %311 = vmatpush2.msra.mxu0 %v165
    %312 = vmatprep.subr.mxu0 %v164
    %313 = vmatpush2.msra.mxu0 %v163
    %314 = vmatprep.subr.mxu0 %v162
    %315 = vmatpush2.msra.mxu0 %v161
    %316 = vmatprep.subr.mxu0 %v160
    %317 = vmatpush2.msra.mxu0 %v159
    %318 = vmatprep.subr.mxu0 %v158
    %319 = vmatpush2.msra.mxu0 %v157
    %320 = vmatprep.subr.mxu0 %v156
    %321 = vmatpush2.msra.mxu0 %v155
    %322 = vmatprep.subr.mxu0 %v154
    %323 = vmatpush2.msra.mxu0 %v153
    %324 = vmatprep.subr.mxu0 %v152
    %325 = vmatpush2.msra.mxu0 %v151
    %326 = vmatprep.subr.mxu0 %v150
    %327 = vmatpush2.msra.mxu0 %v149
    %328 = vmatprep.subr.mxu0 %v148
    %329 = vmatpush2.msra.mxu0 %v147
    %330 = vmatprep.subr.mxu0 %v146
    %331 = vmatpush2.msra.mxu0 %v145
    %332 = vmatprep.subr.mxu0 %v144
    %333 = vmatpush2.msra.mxu0 %v143
    %334 = vmatprep.mubr.f32.mxu0 %v194
    %335 = vmatmul.mubr.f32.gmra.mxu0 %v193
    %v336 = vpop.f32.mrf.mxu0
    %v337 = vadd.f32 %v266, %v336
    %v338 = vpop.f32.mrf.mxu0
    %v339 = vadd.f32 %v268, %v338
    %340 = vdwg.mxu0
    %v343 = vcombine.low %v337, %v339
    %v344 = vcombine.high %v337, %v339
    %347 = vst [vmem:[#allocation7] sm:$0xff] %v343
    %348 = vst [vmem:[#allocation7 + $0x8] sm:$0xff] %v344
    // Predicated region
    $region22: #{tpu_custom_call.1} parent=1 // pred_check
      _
    $region23: #{tpu_custom_call.1} parent=1 // pred_check_branch
      %350 = sbr.rel (0) target = $region25
    $region24: #{tpu_custom_call.1} parent=1 // pred_region
      %s352 = ssub.s32 256, 128
      %353 = vsyncadd [#allocation4], %s352
      %s354 = sshll.u32 [#allocation7], 4
      %s355 = int_to_ptr.vmem [resolvable:$true] %s354
      %360 = dma.vmem_to_hbm [thread:$0]  %s355, 128, %s3, [#allocation4], 128, 128, 8
    $region25: #{tpu_custom_call.1} parent=1 // pred_fallthru
      _
    // Predicated region
    $region26: #{tpu_custom_call.1} parent=1 // pred_check
      _
    $region27: #{tpu_custom_call.1} parent=1 // pred_check_branch
      %362 = sbr.rel (0) target = $region29
    $region28: #{tpu_custom_call.1} parent=1 // pred_region
      %363 = dma.done [#allocation4], 256
    $region29: #{tpu_custom_call.1} parent=1 // pred_fallthru
      _
    %364 = vsyncpa [#allocation3], 1
    %365 = vsyncpa [#allocation6], 1
    %366 = vsyncpa [#allocation4], 1

</llo_original>
